<compile_context>
chip_gen: v5e
topology: v5e:2x2
jax: 0.10.0
libtpu: 0.0.40
codegen_flags: <defaults>
</compile_context>

<pallas_src>
import functools

import numpy as np
import jax
import jax.numpy as jnp
from jax.experimental import pallas as pl
from jax.experimental.pallas import tpu as pltpu


# ----------------------------------------------------------------------------
# Kernel 1: parallel input projection  x_proj = x @ W_ih^T + (b_ih + b_hh)
# ----------------------------------------------------------------------------
def _input_proj_kernel(x_ref, w_ref, b_ref, out_ref):
    # x_ref: (tile_m, E) matmul_dtype, w_ref: (E, 4H) matmul_dtype,
    # b_ref: (1, 4H) f32, out_ref: (tile_m, 4H) f32
    out_ref[...] = (
        jnp.dot(x_ref[...], w_ref[...], preferred_element_type=jnp.float32)
        + b_ref[...]
    )


# ----------------------------------------------------------------------------
# Kernel 2: sequential LSTM recurrence (block_t timesteps / grid step) + FC
# ----------------------------------------------------------------------------
def _lstm_recurrent_kernel(xp_ref, whh_hbm, wfc_ref, bfc_ref, out_ref,
                           whh_sc, dma_sem, h_sc, c_sc,
                           *, hidden_dim, block_t, seq_len, matmul_dtype):
    """One grid step == `block_t` LSTM timesteps.

    xp_ref  : (block_t, B, 4H) f32   precomputed gate pre-activations
    whh_hbm : (H, 4H) HBM ref        hidden->gates weights (transposed)
    wfc_ref : (H, C)                 classifier weight (transposed)
    bfc_ref : (1, C) f32             classifier bias
    out_ref : (B, C) f32             logits (written on the last grid step)
    whh_sc  : (H, 4H) VMEM scratch   single-buffered copy of W_hh^T
    h_sc/c_sc: (B, H) f32 scratch    recurrent state, resident across the grid
    """
    blk = pl.program_id(0)
    H = hidden_dim

    @pl.when(blk == 0)
    def _init():
        # One-time, single-buffered weight load (avoids pipeline double-buffer).
        cp = pltpu.make_async_copy(whh_hbm, whh_sc, dma_sem)
        cp.start()
        cp.wait()
        h_sc[...] = jnp.zeros_like(h_sc)
        c_sc[...] = jnp.zeros_like(c_sc)

    whh = whh_sc[...]                                   # (H, 4H), matmul_dtype
    needs_mask = (seq_len % block_t) != 0               # static Python bool

    def step(s, carry):
        h, c = carry
        # Only the recurrent contraction remains on the serial path.
        gates = xp_ref[s] + jnp.dot(h.astype(matmul_dtype), whh,
                                    preferred_element_type=jnp.float32)
        # PyTorch LSTM gate order: input, forget, cell, output.
        i_g = jax.nn.sigmoid(gates[:, 0 * H:1 * H])
        f_g = jax.nn.sigmoid(gates[:, 1 * H:2 * H])
        g_g = jnp.tanh(gates[:, 2 * H:3 * H])
        o_g = jax.nn.sigmoid(gates[:, 3 * H:4 * H])
        c_new = f_g * c + i_g * g_g
        h_new = o_g * jnp.tanh(c_new)
        if needs_mask:
            # Freeze the state on padded timesteps (t >= T) of the last block.
            t_glob = blk * block_t + s
            valid = jnp.full((h.shape[0], 1), t_glob, dtype=jnp.int32) < seq_len
            h_new = jnp.where(valid, h_new, h)
            c_new = jnp.where(valid, c_new, c)
        return h_new, c_new

    h, c = jax.lax.fori_loop(0, block_t, step, (h_sc[...], c_sc[...]),
                             unroll=True)
    h_sc[...] = h
    c_sc[...] = c

    @pl.when(blk == pl.num_programs(0) - 1)
    def _finish():
        out_ref[...] = (
            jnp.dot(h.astype(matmul_dtype), wfc_ref[...],
                    preferred_element_type=jnp.float32)
            + bfc_ref[...]
        )


# ----------------------------------------------------------------------------
# Wrapper
# ----------------------------------------------------------------------------
def lstm_classifier_forward(token_ids, params, *, block_t=16,
                            matmul_dtype=jnp.bfloat16):
    """Forward pass equivalent to LSTMClassifier.forward(x)."""
    emb_w, w_ih, w_hh, b_ih, b_hh, w_fc, b_fc = (
        params["embedding"], params["w_ih"], params["w_hh"],
        params["b_ih"], params["b_hh"], params["w_fc"], params["b_fc"])

    B, T = token_ids.shape
    E = emb_w.shape[1]
    H = w_hh.shape[1]
    C = w_fc.shape[0]
    mdt = matmul_dtype

    block_t = max(1, min(block_t, T))
    n_blocks = pl.cdiv(T, block_t)
    T_pad = n_blocks * block_t

    # --- Glue (XLA): gather the embeddings directly in time-major order. -----
    ids_tm = jnp.transpose(token_ids).astype(jnp.int32)          # (T, B) tiny
    if T_pad != T:
        ids_tm = jnp.pad(ids_tm, ((0, T_pad - T), (0, 0)))       # pad time axis
    x_tme = jnp.take(emb_w, ids_tm, axis=0)                      # (T_pad, B, E)

    # --- Hoisted input projection: one big parallel matmul over T*B rows. ----
    TB = T_pad * B
    x2d = x_tme.reshape(TB, E).astype(mdt)
    wih_t = jnp.transpose(w_ih).astype(mdt)                      # (E, 4H)
    bias = (b_ih + b_hh).astype(jnp.float32).reshape(1, 4 * H)

    tile_m = TB if TB <= 512 else 512
    x_proj = pl.pallas_call(
        _input_proj_kernel,
        out_shape=jax.ShapeDtypeStruct((TB, 4 * H), jnp.float32),
        grid_spec=pltpu.PrefetchScalarGridSpec(
            num_scalar_prefetch=0,
            grid=(pl.cdiv(TB, tile_m),),
            in_specs=[
                pl.BlockSpec((tile_m, E), lambda i: (i, 0)),
                pl.BlockSpec((E, 4 * H), lambda i: (0, 0)),
                pl.BlockSpec((1, 4 * H), lambda i: (0, 0)),
            ],
            out_specs=pl.BlockSpec((tile_m, 4 * H), lambda i: (i, 0)),
        ),
        compiler_params=pltpu.CompilerParams(
            dimension_semantics=("parallel",)),
    )(x2d, wih_t, bias).reshape(T_pad, B, 4 * H)

    # --- Sequential recurrence + classifier head. -----------------------------
    whh_t = jnp.transpose(w_hh).astype(mdt)                      # (H, 4H)
    wfc_t = jnp.transpose(w_fc).astype(mdt)                      # (H, C)
    bfc = b_fc.astype(jnp.float32).reshape(1, C)

    kernel = functools.partial(
        _lstm_recurrent_kernel,
        hidden_dim=H, block_t=block_t, seq_len=T, matmul_dtype=mdt)

    grid_spec = pltpu.PrefetchScalarGridSpec(
        num_scalar_prefetch=0,
        grid=(n_blocks,),
        in_specs=[
            pl.BlockSpec((block_t, B, 4 * H), lambda i: (i, 0, 0)),  # x_proj blk
            pl.BlockSpec(memory_space=pl.ANY),                       # W_hh^T HBM
            pl.BlockSpec((H, C), lambda i: (0, 0)),                  # W_fc^T
            pl.BlockSpec((1, C), lambda i: (0, 0)),                  # b_fc
        ],
        out_specs=pl.BlockSpec((B, C), lambda i: (0, 0)),
        scratch_shapes=[
            pltpu.VMEM((H, 4 * H), mdt),        # single-buffered W_hh^T
            pltpu.SemaphoreType.DMA,            # its DMA semaphore
            pltpu.VMEM((B, H), jnp.float32),    # h state
            pltpu.VMEM((B, H), jnp.float32),    # c state
        ],
    )

    return pl.pallas_call(
        kernel,
        out_shape=jax.ShapeDtypeStruct((B, C), jnp.float32),
        grid_spec=grid_spec,
        compiler_params=pltpu.CompilerParams(
            dimension_semantics=("arbitrary",)),       # sequential recurrence
    )(x_proj, whh_t, wfc_t, bfc)


# ----------------------------------------------------------------------------
# Pure-JAX reference (faithful per-step PyTorch LSTM semantics, all f32)
# ----------------------------------------------------------------------------
def _reference_forward(token_ids, params):
    emb_w, w_ih, w_hh, b_ih, b_hh, w_fc, b_fc = (
        params["embedding"], params["w_ih"], params["w_hh"],
        params["b_ih"], params["b_hh"], params["w_fc"], params["b_fc"])
    B, T = token_ids.shape
    H = w_hh.shape[1]
    x = jnp.take(emb_w, token_ids, axis=0)                  # (B, T, E)

    def step(carry, x_t):
        h, c = carry
        gates = x_t @ w_ih.T + b_ih + h @ w_hh.T + b_hh
        i = jax.nn.sigmoid(gates[:, 0 * H:1 * H])
        f = jax.nn.sigmoid(gates[:, 1 * H:2 * H])
        g = jnp.tanh(gates[:, 2 * H:3 * H])
        o = jax.nn.sigmoid(gates[:, 3 * H:4 * H])
        c_new = f * c + i * g
        h_new = o * jnp.tanh(c_new)
        return (h_new, c_new), None

    h0 = jnp.zeros((B, H), jnp.float32)
    c0 = jnp.zeros((B, H), jnp.float32)
    (h_last, _), _ = jax.lax.scan(step, (h0, c0), jnp.transpose(x, (1, 0, 2)))
    return h_last @ w_fc.T + b_fc


def make_params(key, vocab_size, embed_dim, hidden_dim, num_class):
    ks = jax.random.split(key, 7)
    H = hidden_dim
    s = 1.0 / np.sqrt(H)
    return {
        # Embedding: randn - 0.5 (as in the module's __init__)
        "embedding": jax.random.normal(ks[0], (vocab_size, embed_dim),
                                       jnp.float32) - 0.5,
        # LSTM params: uniform(-1/sqrt(H), 1/sqrt(H)) like torch.nn.LSTM default
        "w_ih": jax.random.uniform(ks[1], (4 * H, embed_dim), jnp.float32, -s, s),
        "w_hh": jax.random.uniform(ks[2], (4 * H, H), jnp.float32, -s, s),
        "b_ih": jax.random.uniform(ks[3], (4 * H,), jnp.float32, -s, s),
        "b_hh": jax.random.uniform(ks[4], (4 * H,), jnp.float32, -s, s),
        # Linear(H, num_class)
        "w_fc": jax.random.uniform(ks[5], (num_class, H), jnp.float32, -s, s),
        "b_fc": jax.random.uniform(ks[6], (num_class,), jnp.float32, -s, s),
    }


if __name__ == "__main__":
    vocab_size, embed_dim, hidden_dim, num_class = 16, 32, 32, 4
    B, T = 4, 8

    key = jax.random.PRNGKey(0)
    k_tok, k_par = jax.random.split(key)

    params = make_params(k_par, vocab_size, embed_dim, hidden_dim, num_class)
    token_ids = jax.random.randint(k_tok, (B, T), 0, vocab_size, dtype=jnp.int32)

    ref = jax.block_until_ready(_reference_forward(token_ids, params))

    # Strict check: f32 matmul path, block_t=3 exercises multi-block state
    # carry across grid iterations AND the padded-tail freeze path.
    out_f32 = jax.block_until_ready(
        lstm_classifier_forward(token_ids, params,
                                block_t=3, matmul_dtype=jnp.float32))
    np.testing.assert_allclose(np.asarray(out_f32), np.asarray(ref),
                               rtol=1e-4, atol=1e-4)

    # Fast path: bf16 MXU operands (f32 accumulation + f32 gate math),
    # whole sequence in a single grid block.
    out_bf16 = jax.block_until_ready(
        lstm_classifier_forward(token_ids, params,
                                block_t=8, matmul_dtype=jnp.bfloat16))
    np.testing.assert_allclose(np.asarray(out_bf16), np.asarray(ref),
                               rtol=5e-2, atol=5e-2)

    print("KERNEL_OK")
</pallas_src>

<mosaic_0001>
module attributes {stable_mosaic.version = 11 : i64} {
  func.func @_input_proj_kernel(%arg0: i32, %arg1: memref<36x32xf32, #tpu.memory_space<vmem>>, %arg2: memref<32x128xf32, #tpu.memory_space<vmem>>, %arg3: memref<1x128xf32, #tpu.memory_space<vmem>>, %arg4: memref<36x128xf32, #tpu.memory_space<vmem>>) attributes {dimension_semantics = [#tpu.dimension_semantics<parallel>], iteration_bounds = array<i64: 1>, scalar_prefetch = 0 : i64, scratch_operands = 0 : i64, tpu.core_type = #tpu.core_type<tc>, window_params = [{transform_indices = @transform_0, window_bounds = array<i64: 36, 32>}, {pipeline_mode = #tpu.pipeline_mode<synchronous>, transform_indices = @transform_1, window_bounds = array<i64: 32, 128>}, {pipeline_mode = #tpu.pipeline_mode<synchronous>, transform_indices = @transform_2, window_bounds = array<i64: 1, 128>}, {transform_indices = @transform_3, window_bounds = array<i64: 36, 128>}]} {
    %c0 = arith.constant 0 : index
    %c0_0 = arith.constant 0 : index
    %0 = vector.load %arg1[%c0, %c0_0] : memref<36x32xf32, #tpu.memory_space<vmem>>, vector<36x32xf32>
    %c0_1 = arith.constant 0 : index
    %c0_2 = arith.constant 0 : index
    %1 = vector.load %arg2[%c0_1, %c0_2] : memref<32x128xf32, #tpu.memory_space<vmem>>, vector<32x128xf32>
    %cst = arith.constant dense<0.000000e+00> : vector<36x128xf32>
    %2 = tpu.matmul %0, %1, %cst {dimension_numbers = #tpu.dot_dimension_numbers<[1], [0], [0], [1], [0, 0, 1, 1], [], []>} : vector<36x32xf32>, vector<32x128xf32>, vector<36x128xf32> -> vector<36x128xf32>
    %c0_3 = arith.constant 0 : index
    %c0_4 = arith.constant 0 : index
    %3 = vector.load %arg3[%c0_3, %c0_4] : memref<1x128xf32, #tpu.memory_space<vmem>>, vector<1x128xf32>
    %4 = vector.broadcast %3 : vector<1x128xf32> to vector<36x128xf32>
    %5 = arith.addf %2, %4 : vector<36x128xf32>
    %c0_5 = arith.constant 0 : index
    %c0_6 = arith.constant 0 : index
    %6 = vector.load %arg4[%c0_5, %c0_6] : memref<36x128xf32, #tpu.memory_space<vmem>>, vector<36x128xf32>
    tpu.vector_store %arg4[%c0_5, %c0_6], %5 {strides = array<i32>} : memref<36x128xf32, #tpu.memory_space<vmem>>, vector<36x128xf32>,
    return
  }
  func.func @transform_0(%arg0: i32) -> (i32, i32) {
    %c0_i32 = arith.constant 0 : i32
    %c0_i32_0 = arith.constant 0 : i32
    return %arg0, %c0_i32 : i32, i32
  }
  func.func @transform_1(%arg0: i32) -> (i32, i32) {
    %c0_i32 = arith.constant 0 : i32
    %c0_i32_0 = arith.constant 0 : i32
    %c0_i32_1 = arith.constant 0 : i32
    return %c0_i32, %c0_i32_0 : i32, i32
  }
  func.func @transform_2(%arg0: i32) -> (i32, i32) {
    %c0_i32 = arith.constant 0 : i32
    %c0_i32_0 = arith.constant 0 : i32
    %c0_i32_1 = arith.constant 0 : i32
    return %c0_i32, %c0_i32_0 : i32, i32
  }
  func.func @transform_3(%arg0: i32) -> (i32, i32) {
    %c0_i32 = arith.constant 0 : i32
    %c0_i32_0 = arith.constant 0 : i32
    return %arg0, %c0_i32 : i32, i32
  }
}

</mosaic_0001>

<llo_original>
// kernel: tpu_custom_call.1
$region0: #{tpu_custom_call.1}
  #allocation0 [shape = 'u32[]', space=smem, size = 0x4, offset = 0x4, fixed_abs, tag = 'smem constant byte address 0x4 - core index']
  #allocation1 [shape = 'u32[72,128]{1,0:T(1,128)}', space=vmem, size = 0x9000, scoped, tag = 'internal scratch']
  %s0 = inlined_call_operand.vmem [shape: f32[36,32], index: 0, kind: input, shape index: {}]
  %s1 = inlined_call_operand.vmem [shape: f32[32,128], index: 1, kind: input, shape index: {}]
  %s2 = inlined_call_operand.vmem [shape: f32[1,128], index: 2, kind: input, shape index: {}]
  %s3 = inlined_call_operand.hbm [shape: f32[36,128], index: 3, kind: output, shape index: {}]
  %s4 = sld [smem:[#allocation0]]
  $region22: #{tpu_custom_call.1} parent=0
    _
  %s6 = ssub.s32 1, %s4
  %s7 = scalar_select 0, %s6, %s4
  $region1: #{tpu_custom_call.1} parent=0
    #allocation2 [shape = 'u8[20480]{0}', space=vmem, size = 0x5000, scoped, tag = 'output window, operand 0, single buffered']
    #allocation3 [shape = 's32[1]{0}', space=sflag, size = 0x4, scoped, tag = 'scoped memory for tpu_custom_call.1']
    %8 = vsyncpa [#allocation3], 0
    // Predicated region
    $region2: #{tpu_custom_call.1} parent=1 // pred_check
      _
    $region3: #{tpu_custom_call.1} parent=1 // pred_check_branch
      %10 = sbr.rel (0) target = $region5
    $region4: #{tpu_custom_call.1} parent=1 // pred_region
      _
    $region5: #{tpu_custom_call.1} parent=1 // pred_fallthru
      _
    // Predicated region
    $region6: #{tpu_custom_call.1} parent=1 // pred_check
      _
    $region7: #{tpu_custom_call.1} parent=1 // pred_check_branch
      %12 = sbr.rel (0) target = $region9
    $region8: #{tpu_custom_call.1} parent=1 // pred_region
      _
    $region9: #{tpu_custom_call.1} parent=1 // pred_fallthru
      _
    // Predicated region
    $region10: #{tpu_custom_call.1} parent=1 // pred_check
      _
    $region11: #{tpu_custom_call.1} parent=1 // pred_check_branch
      %14 = sbr.rel (0) target = $region13
    $region12: #{tpu_custom_call.1} parent=1 // pred_region
      _
    $region13: #{tpu_custom_call.1} parent=1 // pred_fallthru
      _
    %v15 = vld [vmem:[%s0] sm:$0xff]
    %v16 = vld [vmem:[%s0 + $0x8] sm:$0xff]
    %v17 = vld [vmem:[%s0 + $0x10] sm:$0xff]
    %v18 = vld [vmem:[%s0 + $0x18] sm:$0xff]
    %v19 = vld [vmem:[%s0 + $0x20] sm:$0xf]
    %v20 = vld [vmem:[%s1] sm:$0xff]
    %v21 = vld [vmem:[%s1 + $0x8] sm:$0xff]
    %v22 = vld [vmem:[%s1 + $0x10] sm:$0xff]
    %v23 = vld [vmem:[%s1 + $0x18] sm:$0xff]
    %v24 = vld [vmem:[%s2] sm:$0x1]
    %v26 = vperm.slane %v24, 0
    %vm28 = vcmask 261120
    %v30 = vsel %vm28, %v15, 0
    %v33 = vsel %vm28, %v16, 0
    %v36 = vsel %vm28, %v17, 0
    %v39 = vsel %vm28, %v18, 0
    %v42 = vsel %vm28, %v19, 0
    %44 = vmatpush.msra.mxu0 0.0
    %45 = vmatpush.msra.mxu0 0.0
    %46 = vmatpush.msra.mxu0 0.0
    %47 = vmatpush.msra.mxu0 0.0
    %48 = vmatpush.msra.mxu0 0.0
    %49 = vmatpush.msra.mxu0 0.0
    %50 = vmatpush.msra.mxu0 0.0
    %51 = vmatpush.msra.mxu0 0.0
    %52 = vmatpush.msra.mxu0 0.0
    %53 = vmatpush.msra.mxu0 0.0
    %54 = vmatpush.msra.mxu0 0.0
    %55 = vmatpush.msra.mxu0 0.0
    %56 = vmatpush.msra.mxu0 %v23
    %57 = vmatpush.msra.mxu0 %v22
    %58 = vmatpush.msra.mxu0 %v21
    %59 = vmatpush.msra.mxu0 %v20
    %60 = vmatmul.f32.gmra.mxu0 %v30
    %v61 = vpop.f32.mrf.mxu0
    %v62 = vadd.f32 %v26, %v61
    %63 = vmatmul.f32.gmra.mxu0 %v33
    %v64 = vpop.f32.mrf.mxu0
    %v65 = vadd.f32 %v26, %v64
    %66 = vmatmul.f32.gmra.mxu0 %v36
    %v67 = vpop.f32.mrf.mxu0
    %v68 = vadd.f32 %v26, %v67
    %69 = vmatmul.f32.gmra.mxu0 %v39
    %v70 = vpop.f32.mrf.mxu0
    %v71 = vadd.f32 %v26, %v70
    %72 = vmatmul.f32.gmra.mxu0 %v42
    %v73 = vpop.f32.mrf.mxu0
    %v74 = vadd.f32 %v26, %v73
    %75 = vdwg.mxu0
    %76 = vst [vmem:[#allocation2] sm:$0xff] %v62
    %77 = vst [vmem:[#allocation2 + $0x8] sm:$0xff] %v65
    %78 = vst [vmem:[#allocation2 + $0x10] sm:$0xff] %v68
    %79 = vst [vmem:[#allocation2 + $0x18] sm:$0xff] %v71
    %80 = vst [vmem:[#allocation2 + $0x20] sm:$0xf] %v74
    // Predicated region
    $region14: #{tpu_custom_call.1} parent=1 // pred_check
      _
    $region15: #{tpu_custom_call.1} parent=1 // pred_check_branch
      %82 = sbr.rel (0) target = $region17
    $region16: #{tpu_custom_call.1} parent=1 // pred_region
      %84 = vsyncadd [#allocation3], 0
      %s85 = sshll.u32 [#allocation2], 4
      %s86 = int_to_ptr.vmem [resolvable:$true] %s85
      %s87 = sshll.u32 %s3, 4
      %s88 = int_to_ptr.hbm [resolvable:$true] %s87
      %93 = dma.vmem_to_hbm [thread:$0]  %s86, 640, %s88, [#allocation3], 128, 128, 8
    $region17: #{tpu_custom_call.1} parent=1 // pred_fallthru
      _
    // Predicated region
    $region18: #{tpu_custom_call.1} parent=1 // pred_check
      _
    $region19: #{tpu_custom_call.1} parent=1 // pred_check_branch
      %95 = sbr.rel (0) target = $region21
    $region20: #{tpu_custom_call.1} parent=1 // pred_region
      %97 = dma.done [#allocation3], 640
    $region21: #{tpu_custom_call.1} parent=1 // pred_fallthru
      _
    %98 = vsyncpa [#allocation3], 1

</llo_original>
